<compile_context>
chip_gen: v6e
topology: v6e:2x2x1
jax: 0.10.0
libtpu: 0.0.40
codegen_flags: <defaults>
</compile_context>

<pallas_src>
import functools

import jax
import jax.numpy as jnp
from jax import lax
from jax.experimental import pallas as pl
from jax.experimental.pallas import tpu as pltpu

HIDDEN1 = 128   # fc1_1 / fc1_2 output width
HIDDEN2 = 256   # fc2 width
W3_ROWS = 16    # bf16 sublane-tile-aligned block holding w3 (row 0)
_TB_CAP = 2048  # rows per grid step; keeps per-step VMEM well under v5e's 16 MiB default


def _round_up(x, m):
    return ((x + m - 1) // m) * m


def _pick_batch_tiling(batch):
    """Returns (tile_rows, padded_batch)."""
    b8 = _round_up(batch, 8)
    if b8 <= 1024:
        # Single grid step; out block == full output extent (any width is legal).
        return b8, b8
    # >= 2 grid steps so v7x can shard the batch across both TensorCores;
    # tiles are 128-aligned so (1, tb) output blocks stay lane-dense/aligned.
    n_steps = max(2, -(-b8 // _TB_CAP))
    tb = _round_up(-(-b8 // n_steps), 128)
    return tb, n_steps * tb


def _disc_kernel(s_ref, a_ref, l_ref, w_ref, b_ref, out_ref, x_buf,
                 *, sd, ad, din, din_pad):
    """One batch tile of the DWBC Discriminator forward.

    s_ref  : (TB, sd)  f32   state
    a_ref  : (TB, ad)  f32   action
    l_ref  : (TB, ad)  f32   log_pi
    w_ref  : (din_pad + 256 + 16, 256) bf16
             rows [0, din_pad)            = block-structured W1
             rows [din_pad, din_pad+256)  = W2
             row  [din_pad+256]           = w3 (as a 256-wide row)
    b_ref  : (8, 256) f32    row0 = [b1_1|b1_2], row1 = b2, element [2,0] = b3
    out_ref: (1, TB)  f32    lane-dense output (batch on lanes)
    x_buf  : (TB, din_pad) bf16 VMEM scratch for the fused layer-1 input
    """
    tb = x_buf.shape[0]

    # ---- assemble [state | action | log_pi | 0-pad] in VMEM (bf16) ----
    x_buf[:, pl.ds(0, sd)] = s_ref[...].astype(jnp.bfloat16)
    x_buf[:, pl.ds(sd, ad)] = a_ref[...].astype(jnp.bfloat16)
    x_buf[:, pl.ds(sd + ad, ad)] = l_ref[...].astype(jnp.bfloat16)
    if din_pad > din:  # zero the pad columns every step (scratch is uninitialized)
        x_buf[:, pl.ds(din, din_pad - din)] = jnp.zeros(
            (tb, din_pad - din), jnp.bfloat16)
    x = x_buf[...]                                           # (TB, Dp) bf16

    # ---- resident weight slabs (constant index_map -> DMA'd once) ----
    w1 = w_ref[pl.ds(0, din_pad), :]                         # (Dp, 256)  bf16
    w2 = w_ref[pl.ds(din_pad, HIDDEN2), :]                   # (256, 256) bf16
    w3 = w_ref[pl.ds(din_pad + HIDDEN2, 1), :]               # (1, 256)   bf16
    b1 = b_ref[pl.ds(0, 1), :]                               # (1, 256)   f32
    b2 = b_ref[pl.ds(1, 1), :]                               # (1, 256)   f32
    b3 = b_ref[pl.ds(2, 1), pl.ds(0, 1)]                     # (1, 1)     f32

    # Fused layer 1: h[:, :128] = fc1_1([state|action]), h[:, 128:] = fc1_2(log_pi)
    h = jnp.dot(x, w1, preferred_element_type=jnp.float32) + b1
    h = jnp.maximum(h, 0.0)

    # fc2 on the (free) concat [d1 | d2] == h
    d = jnp.dot(h.astype(jnp.bfloat16), w2,
                preferred_element_type=jnp.float32) + b2
    d = jnp.maximum(d, 0.0)

    # fc3: (1,256) . (TB,256)^T -> (1, TB); M=1 stream, lane-dense result row.
    z = lax.dot_general(w3, d.astype(jnp.bfloat16),
                        dimension_numbers=(((1,), (1,)), ((), ())),
                        preferred_element_type=jnp.float32)   # (1, TB)

    out_ref[...] = jnp.clip(jax.nn.sigmoid(z + b3), 0.1, 0.9)


def pack_params(params, state_dim, action_dim):
    """One-time packing of the 8 Linear params into (w_packed bf16, b_packed f32)."""
    w11, b11, w12, b12, w2, b2, w3, b3 = params
    sa = state_dim + action_dim
    din = sa + action_dim
    din_pad = _round_up(din, 16)          # keeps W2 / w3 offsets bf16 tile-aligned

    w1_blk = jnp.zeros((din_pad, HIDDEN2), jnp.float32)
    w1_blk = w1_blk.at[:sa, :HIDDEN1].set(w11)
    w1_blk = w1_blk.at[sa:din, HIDDEN1:].set(w12)
    w3_blk = jnp.zeros((W3_ROWS, HIDDEN2), jnp.float32)
    w3_blk = w3_blk.at[0, :].set(w3.reshape(-1))
    w_packed = jnp.concatenate([w1_blk, w2, w3_blk], axis=0).astype(jnp.bfloat16)

    b_packed = jnp.zeros((8, HIDDEN2), jnp.float32)
    b_packed = b_packed.at[0, :HIDDEN1].set(b11.reshape(-1))
    b_packed = b_packed.at[0, HIDDEN1:].set(b12.reshape(-1))
    b_packed = b_packed.at[1, :].set(b2.reshape(-1))
    b_packed = b_packed.at[2, 0].set(b3.reshape(-1)[0])
    return w_packed, b_packed


@jax.jit
def discriminator_forward(state, action, log_pi, w_packed, b_packed):
    """Pallas implementation of Discriminator.forward; returns (B, 1) float32."""
    B, sd = state.shape
    ad = action.shape[1]
    din = sd + 2 * ad
    din_pad = _round_up(din, 16)
    assert w_packed.shape == (din_pad + HIDDEN2 + W3_ROWS, HIDDEN2)
    assert b_packed.shape == (8, HIDDEN2)

    tb, b_pad = _pick_batch_tiling(B)
    if b_pad != B:
        pad = ((0, b_pad - B), (0, 0))
        state = jnp.pad(state, pad)
        action = jnp.pad(action, pad)
        log_pi = jnp.pad(log_pi, pad)

    grid = (b_pad // tb,)
    flops = 2 * b_pad * (din_pad * HIDDEN2 + HIDDEN2 * HIDDEN2 + HIDDEN2)
    bytes_accessed = (b_pad * (sd + 2 * ad) * 4        # f32 activations in
                      + w_packed.size * 2 + b_packed.size * 4
                      + b_pad * 4)                     # f32 out

    kernel = functools.partial(_disc_kernel, sd=sd, ad=ad, din=din, din_pad=din_pad)
    out = pl.pallas_call(
        kernel,
        out_shape=jax.ShapeDtypeStruct((1, b_pad), jnp.float32),
        grid=grid,
        in_specs=[
            pl.BlockSpec((tb, sd), lambda i: (i, 0)),                       # state
            pl.BlockSpec((tb, ad), lambda i: (i, 0)),                       # action
            pl.BlockSpec((tb, ad), lambda i: (i, 0)),                       # log_pi
            pl.BlockSpec((din_pad + HIDDEN2 + W3_ROWS, HIDDEN2),
                         lambda i: (0, 0)),                                 # weights (resident)
            pl.BlockSpec((8, HIDDEN2), lambda i: (0, 0)),                   # biases (resident)
        ],
        out_specs=pl.BlockSpec((1, tb), lambda i: (0, i)),
        scratch_shapes=[pltpu.VMEM((tb, din_pad), jnp.bfloat16)],
        compiler_params=pltpu.CompilerParams(
            dimension_semantics=("parallel",)),
        cost_estimate=pl.CostEstimate(flops=flops,
                                      transcendentals=b_pad,
                                      bytes_accessed=bytes_accessed),
    )(state, action, log_pi, w_packed, b_packed)

    return out[0, :B].reshape(B, 1)


def init_params(key, state_dim, action_dim):
    """PyTorch nn.Linear default init (U(+-1/sqrt(fan_in))); weights stored (in, out)."""
    ks = jax.random.split(key, 8)

    def uniform(k, shape, fan_in):
        bound = 1.0 / jnp.sqrt(jnp.float32(fan_in))
        return jax.random.uniform(k, shape, jnp.float32, -bound, bound)

    sa = state_dim + action_dim
    w11 = uniform(ks[0], (sa, HIDDEN1), sa)
    b11 = uniform(ks[1], (HIDDEN1,), sa)
    w12 = uniform(ks[2], (action_dim, HIDDEN1), action_dim)
    b12 = uniform(ks[3], (HIDDEN1,), action_dim)
    w2 = uniform(ks[4], (HIDDEN2, HIDDEN2), HIDDEN2)
    b2 = uniform(ks[5], (HIDDEN2,), HIDDEN2)
    w3 = uniform(ks[6], (HIDDEN2, 1), HIDDEN2)
    b3 = uniform(ks[7], (1,), HIDDEN2)
    return (w11, b11, w12, b12, w2, b2, w3, b3)


def reference_forward(state, action, log_pi, params):
    """Pure-JAX float32 mirror of the PyTorch module."""
    w11, b11, w12, b12, w2, b2, w3, b3 = params
    sa = jnp.concatenate([state, action], axis=1)
    d1 = jax.nn.relu(sa @ w11 + b11)
    d2 = jax.nn.relu(log_pi @ w12 + b12)
    d = jnp.concatenate([d1, d2], axis=1)
    d = jax.nn.relu(d @ w2 + b2)
    d = jax.nn.sigmoid(d @ w3 + b3)
    return jnp.clip(d, 0.1, 0.9)


if __name__ == "__main__":
    key = jax.random.PRNGKey(0)
    state_dim, action_dim = 16, 4

    k_params, k_data = jax.random.split(key)
    params = init_params(k_params, state_dim, action_dim)
    w_packed, b_packed = pack_params(params, state_dim, action_dim)   # packed once

    # Primary small-shape check, plus one multi-tile check (grid of 2 steps, padded batch).
    for B in (8, 1050):
        k_s, k_a, k_l, k_data = jax.random.split(k_data, 4)
        state = jax.random.normal(k_s, (B, state_dim), jnp.float32)
        action = jax.random.normal(k_a, (B, action_dim), jnp.float32)
        log_pi = jax.random.normal(k_l, (B, action_dim), jnp.float32)

        out = discriminator_forward(state, action, log_pi, w_packed, b_packed)
        out = jax.block_until_ready(out)

        ref = reference_forward(state, action, log_pi, params)
        assert out.shape == (B, 1)
        # bf16 matmul operands (f32 accumulation) vs. f32 reference -> loose tolerance.
        assert jnp.allclose(out, ref, atol=2e-2, rtol=0.0), (
            B, float(jnp.max(jnp.abs(out - ref))))

    print("KERNEL_OK")
</pallas_src>

<mosaic_0001>
module attributes {stable_mosaic.version = 11 : i64} {
  func.func @_disc_kernel(%arg0: i32, %arg1: memref<8x16xf32, #tpu.memory_space<vmem>>, %arg2: memref<8x4xf32, #tpu.memory_space<vmem>>, %arg3: memref<8x4xf32, #tpu.memory_space<vmem>>, %arg4: memref<304x256xbf16, #tpu.memory_space<vmem>>, %arg5: memref<8x256xf32, #tpu.memory_space<vmem>>, %arg6: memref<1x8xf32, #tpu.memory_space<vmem>>, %arg7: memref<8x32xbf16, #tpu.memory_space<vmem>>) attributes {dimension_semantics = [#tpu.dimension_semantics<parallel>], iteration_bounds = array<i64: 1>, scalar_prefetch = 0 : i64, scratch_operands = 1 : i64, tpu.core_type = #tpu.core_type<tc>, window_params = [{transform_indices = @transform_0, window_bounds = array<i64: 8, 16>}, {transform_indices = @transform_1, window_bounds = array<i64: 8, 4>}, {transform_indices = @transform_2, window_bounds = array<i64: 8, 4>}, {pipeline_mode = #tpu.pipeline_mode<synchronous>, transform_indices = @transform_3, window_bounds = array<i64: 304, 256>}, {pipeline_mode = #tpu.pipeline_mode<synchronous>, transform_indices = @transform_4, window_bounds = array<i64: 8, 256>}, {transform_indices = @transform_5, window_bounds = array<i64: 1, 8>}]} {
    %c0 = arith.constant 0 : index
    %c0_0 = arith.constant 0 : index
    %0 = vector.load %arg1[%c0, %c0_0] : memref<8x16xf32, #tpu.memory_space<vmem>>, vector<8x16xf32>
    %1 = arith.truncf %0 : vector<8x16xf32> to vector<8x16xbf16>
    %c0_1 = arith.constant 0 : index
    %c0_2 = arith.constant 0 : index
    %2 = vector.load %arg7[%c0_1, %c0_2] : memref<8x32xbf16, #tpu.memory_space<vmem>>, vector<8x16xbf16>
    tpu.vector_store %arg7[%c0_1, %c0_2], %1 {strides = array<i32>} : memref<8x32xbf16, #tpu.memory_space<vmem>>, vector<8x16xbf16>,
    %c0_3 = arith.constant 0 : index
    %c0_4 = arith.constant 0 : index
    %3 = vector.load %arg2[%c0_3, %c0_4] : memref<8x4xf32, #tpu.memory_space<vmem>>, vector<8x4xf32>
    %4 = arith.truncf %3 : vector<8x4xf32> to vector<8x4xbf16>
    %c0_5 = arith.constant 0 : index
    %c16 = arith.constant 16 : index
    %5 = vector.load %arg7[%c0_5, %c16] : memref<8x32xbf16, #tpu.memory_space<vmem>>, vector<8x4xbf16>
    tpu.vector_store %arg7[%c0_5, %c16], %4 {strides = array<i32>} : memref<8x32xbf16, #tpu.memory_space<vmem>>, vector<8x4xbf16>,
    %c0_6 = arith.constant 0 : index
    %c0_7 = arith.constant 0 : index
    %6 = vector.load %arg3[%c0_6, %c0_7] : memref<8x4xf32, #tpu.memory_space<vmem>>, vector<8x4xf32>
    %7 = arith.truncf %6 : vector<8x4xf32> to vector<8x4xbf16>
    %c0_8 = arith.constant 0 : index
    %c20 = arith.constant 20 : index
    %8 = vector.load %arg7[%c0_8, %c20] : memref<8x32xbf16, #tpu.memory_space<vmem>>, vector<8x4xbf16>
    tpu.vector_store %arg7[%c0_8, %c20], %7 {strides = array<i32>} : memref<8x32xbf16, #tpu.memory_space<vmem>>, vector<8x4xbf16>,
    %cst = arith.constant 0.000000e+00 : bf16
    %9 = vector.broadcast %cst : bf16 to vector<8x8xbf16>
    %c0_9 = arith.constant 0 : index
    %c24 = arith.constant 24 : index
    %10 = vector.load %arg7[%c0_9, %c24] : memref<8x32xbf16, #tpu.memory_space<vmem>>, vector<8x8xbf16>
    tpu.vector_store %arg7[%c0_9, %c24], %9 {strides = array<i32>} : memref<8x32xbf16, #tpu.memory_space<vmem>>, vector<8x8xbf16>,
    %c0_10 = arith.constant 0 : index
    %c0_11 = arith.constant 0 : index
    %11 = vector.load %arg7[%c0_10, %c0_11] : memref<8x32xbf16, #tpu.memory_space<vmem>>, vector<8x32xbf16>
    %c0_12 = arith.constant 0 : index
    %c0_13 = arith.constant 0 : index
    %12 = vector.load %arg4[%c0_12, %c0_13] : memref<304x256xbf16, #tpu.memory_space<vmem>>, vector<32x256xbf16>
    %c32 = arith.constant 32 : index
    %c0_14 = arith.constant 0 : index
    %13 = vector.load %arg4[%c32, %c0_14] : memref<304x256xbf16, #tpu.memory_space<vmem>>, vector<256x256xbf16>
    %c288 = arith.constant 288 : index
    %c0_15 = arith.constant 0 : index
    %14 = vector.load %arg4[%c288, %c0_15] : memref<304x256xbf16, #tpu.memory_space<vmem>>, vector<1x256xbf16>
    %c0_16 = arith.constant 0 : index
    %c0_17 = arith.constant 0 : index
    %15 = vector.load %arg5[%c0_16, %c0_17] : memref<8x256xf32, #tpu.memory_space<vmem>>, vector<1x256xf32>
    %c1 = arith.constant 1 : index
    %c0_18 = arith.constant 0 : index
    %16 = vector.load %arg5[%c1, %c0_18] : memref<8x256xf32, #tpu.memory_space<vmem>>, vector<1x256xf32>
    %c2 = arith.constant 2 : index
    %c0_19 = arith.constant 0 : index
    %17 = vector.load %arg5[%c2, %c0_19] : memref<8x256xf32, #tpu.memory_space<vmem>>, vector<1x1xf32>
    %cst_20 = arith.constant dense<0.000000e+00> : vector<8x256xf32>
    %18 = tpu.matmul %11, %12, %cst_20 {dimension_numbers = #tpu.dot_dimension_numbers<[1], [0], [0], [1], [0, 0, 1, 1], [], []>} : vector<8x32xbf16>, vector<32x256xbf16>, vector<8x256xf32> -> vector<8x256xf32>
    %19 = vector.broadcast %15 : vector<1x256xf32> to vector<8x256xf32>
    %20 = arith.addf %18, %19 : vector<8x256xf32>
    %cst_21 = arith.constant 0.000000e+00 : f32
    %21 = vector.broadcast %cst_21 : f32 to vector<8x256xf32>
    %22 = arith.maximumf %20, %21 : vector<8x256xf32>
    %23 = arith.truncf %22 : vector<8x256xf32> to vector<8x256xbf16>
    %cst_22 = arith.constant dense<0.000000e+00> : vector<8x256xf32>
    %24 = tpu.matmul %23, %13, %cst_22 {dimension_numbers = #tpu.dot_dimension_numbers<[1], [0], [0], [1], [0, 0, 1, 1], [], []>} : vector<8x256xbf16>, vector<256x256xbf16>, vector<8x256xf32> -> vector<8x256xf32>
    %25 = vector.broadcast %16 : vector<1x256xf32> to vector<8x256xf32>
    %26 = arith.addf %24, %25 : vector<8x256xf32>
    %cst_23 = arith.constant 0.000000e+00 : f32
    %27 = vector.broadcast %cst_23 : f32 to vector<8x256xf32>
    %28 = arith.maximumf %26, %27 : vector<8x256xf32>
    %29 = arith.truncf %28 : vector<8x256xf32> to vector<8x256xbf16>
    %cst_24 = arith.constant dense<0.000000e+00> : vector<1x8xf32>
    %30 = tpu.matmul %14, %29, %cst_24 {dimension_numbers = #tpu.dot_dimension_numbers<[1], [1], [0], [0], [0, 0, 1, 0], [], []>} : vector<1x256xbf16>, vector<8x256xbf16>, vector<1x8xf32> -> vector<1x8xf32>
    %31 = vector.broadcast %17 : vector<1x1xf32> to vector<1x8xf32>
    %32 = arith.addf %30, %31 : vector<1x8xf32>
    %33 = arith.negf %32 : vector<1x8xf32>
    %34 = math.exp %33 : vector<1x8xf32>
    %cst_25 = arith.constant 1.000000e+00 : f32
    %35 = vector.broadcast %cst_25 : f32 to vector<1x8xf32>
    %36 = arith.addf %35, %34 : vector<1x8xf32>
    %37 = arith.divf %35, %36 : vector<1x8xf32>
    %cst_26 = arith.constant 1.000000e-01 : f32
    %cst_27 = arith.constant 0.899999976 : f32
    %38 = vector.broadcast %cst_26 : f32 to vector<1x8xf32>
    %39 = arith.maximumf %38, %37 : vector<1x8xf32>
    %40 = vector.broadcast %cst_27 : f32 to vector<1x8xf32>
    %41 = arith.minimumf %40, %39 : vector<1x8xf32>
    %c0_28 = arith.constant 0 : index
    %c0_29 = arith.constant 0 : index
    %42 = vector.load %arg6[%c0_28, %c0_29] : memref<1x8xf32, #tpu.memory_space<vmem>>, vector<1x8xf32>
    tpu.vector_store %arg6[%c0_28, %c0_29], %41 {strides = array<i32>} : memref<1x8xf32, #tpu.memory_space<vmem>>, vector<1x8xf32>,
    return
  }
  func.func @transform_0(%arg0: i32) -> (i32, i32) {
    %c0_i32 = arith.constant 0 : i32
    %c0_i32_0 = arith.constant 0 : i32
    return %arg0, %c0_i32 : i32, i32
  }
  func.func @transform_1(%arg0: i32) -> (i32, i32) {
    %c0_i32 = arith.constant 0 : i32
    %c0_i32_0 = arith.constant 0 : i32
    return %arg0, %c0_i32 : i32, i32
  }
  func.func @transform_2(%arg0: i32) -> (i32, i32) {
    %c0_i32 = arith.constant 0 : i32
    %c0_i32_0 = arith.constant 0 : i32
    return %arg0, %c0_i32 : i32, i32
  }
  func.func @transform_3(%arg0: i32) -> (i32, i32) {
    %c0_i32 = arith.constant 0 : i32
    %c0_i32_0 = arith.constant 0 : i32
    %c0_i32_1 = arith.constant 0 : i32
    return %c0_i32, %c0_i32_0 : i32, i32
  }
  func.func @transform_4(%arg0: i32) -> (i32, i32) {
    %c0_i32 = arith.constant 0 : i32
    %c0_i32_0 = arith.constant 0 : i32
    %c0_i32_1 = arith.constant 0 : i32
    return %c0_i32, %c0_i32_0 : i32, i32
  }
  func.func @transform_5(%arg0: i32) -> (i32, i32) {
    %c0_i32 = arith.constant 0 : i32
    %c0_i32_0 = arith.constant 0 : i32
    return %c0_i32, %arg0 : i32, i32
  }
}

</mosaic_0001>

<llo_original>
// kernel: discriminator_forward.1
$region0: #{discriminator_forward.1}
  #allocation0 [shape = 'u32[]', space=smem, size = 0x4, offset = 0x4, fixed_abs, tag = 'smem constant byte address 0x4 - core index']
  #allocation1 [shape = 'u32[144,128]{1,0:T(1,128)}', space=vmem, size = 0x12000, scoped, tag = 'internal scratch']
  #allocation2 [shape = 'bf16[8,32]{1,0:T(8,128)(2,1)}', space=vmem, size = 0x800, scoped, tag = 'scratch operand']
  %s0 = inlined_call_operand.vmem [shape: f32[8,16], index: 0, kind: input, shape index: {}]
  %s1 = inlined_call_operand.vmem [shape: f32[8,4], index: 1, kind: input, shape index: {}]
  %s2 = inlined_call_operand.vmem [shape: f32[8,4], index: 2, kind: input, shape index: {}]
  %s3 = inlined_call_operand.hbm [shape: bf16[304,256], index: 3, kind: input, shape index: {}]
  %s4 = inlined_call_operand.vmem [shape: f32[8,256], index: 4, kind: input, shape index: {}]
  %s5 = inlined_call_operand.hbm [shape: f32[1,8], index: 5, kind: output, shape index: {}]
  %s6 = sld [smem:[#allocation0]]
  $region34: #{discriminator_forward.1} parent=0
    _
  %s8 = ssub.s32 1, %s6
  %s9 = scalar_select 0, %s8, %s6
  $region1: #{discriminator_forward.1} parent=0
    #allocation3 [shape = 'u8[155648]{0}', space=vmem, size = 0x26000, scoped, tag = 'input window, operand 3, single buffered']
    #allocation4 [shape = 's32[1]{0}', space=sflag, size = 0x4, scoped, tag = 'scoped memory for discriminator_forward.1']
    #allocation5 [shape = 's32[1]{0}', space=sflag, size = 0x4, scoped, tag = 'scoped memory for discriminator_forward.1']
    #allocation6 [shape = 'u8[512]{0}', space=vmem, size = 0x400, scoped, tag = 'output window, operand 0, single buffered']
    %10 = vsyncpa [#allocation4], 0
    %11 = vsyncpa [#allocation5], 0
    // Predicated region
    $region2: #{discriminator_forward.1} parent=1 // pred_check
      _
    $region3: #{discriminator_forward.1} parent=1 // pred_check_branch
      %13 = sbr.rel (0) target = $region5
    $region4: #{discriminator_forward.1} parent=1 // pred_region
      _
    $region5: #{discriminator_forward.1} parent=1 // pred_fallthru
      _
    // Predicated region
    $region6: #{discriminator_forward.1} parent=1 // pred_check
      _
    $region7: #{discriminator_forward.1} parent=1 // pred_check_branch
      %15 = sbr.rel (0) target = $region9
    $region8: #{discriminator_forward.1} parent=1 // pred_region
      _
    $region9: #{discriminator_forward.1} parent=1 // pred_fallthru
      _
    // Predicated region
    $region10: #{discriminator_forward.1} parent=1 // pred_check
      _
    $region11: #{discriminator_forward.1} parent=1 // pred_check_branch
      %17 = sbr.rel (0) target = $region13
    $region12: #{discriminator_forward.1} parent=1 // pred_region
      _
    $region13: #{discriminator_forward.1} parent=1 // pred_fallthru
      _
    // Predicated region
    $region14: #{discriminator_forward.1} parent=1 // pred_check
      _
    $region15: #{discriminator_forward.1} parent=1 // pred_check_branch
      %19 = sbr.rel (0) target = $region17
    $region16: #{discriminator_forward.1} parent=1 // pred_region
      %s21 = ssub.s32 4864, 4864
      %22 = vsyncadd [#allocation4], %s21
      %s23 = sshll.u32 [#allocation3], 4
      %s24 = int_to_ptr.vmem [resolvable:$true] %s23
      %29 = dma.hbm_to_vmem [thread:$0]  %s3, 4864, %s24, [#allocation4], 128, 128, 8
    $region17: #{discriminator_forward.1} parent=1 // pred_fallthru
      _
    // Predicated region
    $region18: #{discriminator_forward.1} parent=1 // pred_check
      _
    $region19: #{discriminator_forward.1} parent=1 // pred_check_branch
      %31 = sbr.rel (0) target = $region21
    $region20: #{discriminator_forward.1} parent=1 // pred_region
      _
    $region21: #{discriminator_forward.1} parent=1 // pred_fallthru
      _
    // Predicated region
    $region22: #{discriminator_forward.1} parent=1 // pred_check
      _
    $region23: #{discriminator_forward.1} parent=1 // pred_check_branch
      %33 = sbr.rel (0) target = $region25
    $region24: #{discriminator_forward.1} parent=1 // pred_region
      %34 = dma.done [#allocation4], 4864
    $region25: #{discriminator_forward.1} parent=1 // pred_fallthru
      _
    %v36 = vld [vmem:[%s0] sm:$0xff]
    %v37 = vpack.c.bf16 %v36, %v36
    %vm38 = vcmask 125952
    %39 = vst.msk [vmem:[#allocation2] sm:$0xf] %vm38, %v37
    %v40 = vld [vmem:[%s1] sm:$0xff]
    %v41 = vpack.c.bf16 %v40, %v40
    %v43 = vunpack.c.l.b16 %v41
    %v44 = vpack.c.b16 %v43, %v43
    %45 = vrot.lane.b32.xlu0 %v44, 16
    %v46 = vpop.permute.xlu0 %45
    %vm48 = vcmask 158848
    %49 = vst.msk [vmem:[#allocation2] sm:$0xf] %vm48, %v46
    %v50 = vld [vmem:[%s2] sm:$0xff]
    %v51 = vpack.c.bf16 %v50, %v50
    %v53 = vunpack.c.l.b16 %v51
    %v54 = vpack.c.b16 %v53, %v53
    %55 = vrot.lane.b32.xlu0 %v54, 20
    %v56 = vpop.permute.xlu0 %55
    %vm58 = vcmask 191648
    %59 = vst.msk [vmem:[#allocation2] sm:$0xf] %vm58, %v56
    %vm60 = vcmask 257216
    %61 = vst.msk [vmem:[#allocation2] sm:$0xf] %vm60, 0
    %v62 = vld [vmem:[#allocation2] sm:$0xf]
    %v63 = vld [vmem:[#allocation3] sm:$0xff]
    %v64 = vld [vmem:[#allocation3 + $0x8] sm:$0xff]
    %v65 = vld [vmem:[#allocation3 + $0x10] sm:$0xff]
    %v66 = vld [vmem:[#allocation3 + $0x18] sm:$0xff]
    %v67 = vld [vmem:[#allocation3 + $0x20] sm:$0xff]
    %v68 = vld [vmem:[#allocation3 + $0x28] sm:$0xff]
    %v69 = vld [vmem:[#allocation3 + $0x30] sm:$0xff]
    %v70 = vld [vmem:[#allocation3 + $0x38] sm:$0xff]
    %v71 = vld [vmem:[#allocation3 + $0x40] sm:$0xff]
    %v72 = vld [vmem:[#allocation3 + $0x48] sm:$0xff]
    %v73 = vld [vmem:[#allocation3 + $0x50] sm:$0xff]
    %v74 = vld [vmem:[#allocation3 + $0x58] sm:$0xff]
    %v75 = vld [vmem:[#allocation3 + $0x60] sm:$0xff]
    %v76 = vld [vmem:[#allocation3 + $0x68] sm:$0xff]
    %v77 = vld [vmem:[#allocation3 + $0x70] sm:$0xff]
    %v78 = vld [vmem:[#allocation3 + $0x78] sm:$0xff]
    %v79 = vld [vmem:[#allocation3 + $0x80] sm:$0xff]
    %v80 = vld [vmem:[#allocation3 + $0x88] sm:$0xff]
    %v81 = vld [vmem:[#allocation3 + $0x90] sm:$0xff]
    %v82 = vld [vmem:[#allocation3 + $0x98] sm:$0xff]
    %v83 = vld [vmem:[#allocation3 + $0xa0] sm:$0xff]
    %v84 = vld [vmem:[#allocation3 + $0xa8] sm:$0xff]
    %v85 = vld [vmem:[#allocation3 + $0xb0] sm:$0xff]
    %v86 = vld [vmem:[#allocation3 + $0xb8] sm:$0xff]
    %v87 = vld [vmem:[#allocation3 + $0xc0] sm:$0xff]
    %v88 = vld [vmem:[#allocation3 + $0xc8] sm:$0xff]
    %v89 = vld [vmem:[#allocation3 + $0xd0] sm:$0xff]
    %v90 = vld [vmem:[#allocation3 + $0xd8] sm:$0xff]
    %v91 = vld [vmem:[#allocation3 + $0xe0] sm:$0xff]
    %v92 = vld [vmem:[#allocation3 + $0xe8] sm:$0xff]
    %v93 = vld [vmem:[#allocation3 + $0xf0] sm:$0xff]
    %v94 = vld [vmem:[#allocation3 + $0xf8] sm:$0xff]
    %v95 = vld [vmem:[#allocation3 + $0x100] sm:$0xff]
    %v96 = vld [vmem:[#allocation3 + $0x108] sm:$0xff]
    %v97 = vld [vmem:[#allocation3 + $0x110] sm:$0xff]
    %v98 = vld [vmem:[#allocation3 + $0x118] sm:$0xff]
    %v99 = vld [vmem:[#allocation3 + $0x120] sm:$0x11]
    %v100 = vld [vmem:[%s4] ss:$8 sm:$0x3]
    %s101 = scalar_lea.vmem %s4, 1
    %v102 = vld [vmem:[%s101] ss:$8 sm:$0x3]
    %v103 = vld [vmem:[%s4 + $0x2] ss:$0 sm:$0xff]
    %v105 = vlaneseq
    %v106 = vshrl.u32 %v105, 7
    %v107 = vsub.s32 0, %v106
    %v108 = vrot.slane %v100, %v107
    %v109 = vlaneseq
    %v110 = vshrl.u32 %v109, 7
    %v111 = vsub.s32 1, %v110
    %v112 = vrot.slane %v100, %v111
    %v119 = vunpack.c.l.b16 %v63
    %v120 = vunpack.c.h.b16 %v63
    %v121 = vunpack.c.l.b16 %v64
    %v122 = vunpack.c.h.b16 %v64
    %v123 = vunpack.c.l.b16 %v65
    %v124 = vunpack.c.h.b16 %v65
    %v125 = vunpack.c.l.b16 %v66
    %v126 = vunpack.c.h.b16 %v66
    %v127 = vpack.c.b16 %v121, %v119
    %v128 = vpack.c.b16 %v122, %v120
    %v129 = vpack.c.b16 %v125, %v123
    %v130 = vpack.c.b16 %v126, %v124
    %vm135 = vcmask 261120
    %v137 = vsel %vm135, %v62, 0
    %139 = vmatprep.subr.bf16.mxu0 0
    %140 = vmatpush1.bf16.msra.mxu0 0
    %141 = vmatprep.subr.bf16.mxu0 0
    %142 = vmatpush1.bf16.msra.mxu0 0
    %143 = vmatprep.subr.bf16.mxu0 0
    %144 = vmatpush1.bf16.msra.mxu0 0
    %145 = vmatprep.subr.bf16.mxu0 0
    %146 = vmatpush1.bf16.msra.mxu0 0
    %147 = vmatprep.subr.bf16.mxu0 0
    %148 = vmatpush1.bf16.msra.mxu0 0
    %149 = vmatprep.subr.bf16.mxu0 0
    %150 = vmatpush1.bf16.msra.mxu0 0
    %151 = vmatprep.subr.bf16.mxu0 %v130
    %152 = vmatpush1.bf16.msra.mxu0 %v129
    %153 = vmatprep.subr.bf16.mxu0 %v128
    %154 = vmatpush1.bf16.msra.mxu0 %v127
    %155 = vmatprep.subr.bf16.mxu0 0
    %156 = vmatpush2.bf16.msra.mxu0 0
    %157 = vmatprep.subr.bf16.mxu0 0
    %158 = vmatpush2.bf16.msra.mxu0 0
    %159 = vmatprep.subr.bf16.mxu0 0
    %160 = vmatpush2.bf16.msra.mxu0 0
    %161 = vmatprep.subr.bf16.mxu0 0
    %162 = vmatpush2.bf16.msra.mxu0 0
    %163 = vmatprep.subr.bf16.mxu0 0
    %164 = vmatpush2.bf16.msra.mxu0 0
    %165 = vmatprep.subr.bf16.mxu0 0
    %166 = vmatpush2.bf16.msra.mxu0 0
    %167 = vmatprep.subr.bf16.mxu0 0
    %168 = vmatpush2.bf16.msra.mxu0 0
    %169 = vmatprep.subr.bf16.mxu0 0
    %170 = vmatpush2.bf16.msra.mxu0 0
    %171 = vmatprep.mubr.bf16.mxu0 0
    %172 = vmatmul.mubr.bf16.gmra.mxu0 %v137
    %v173 = vpop.f32.mrf.mxu0
    %v174 = vadd.f32 %v108, %v173
    %v175 = vpop.f32.mrf.mxu0
    %v176 = vadd.f32 %v112, %v175
    %v177 = vpop.f32.mrf.mxu0
    %v178 = vpop.f32.mrf.mxu0
    %179 = vdwg.mxu0
    %v180 = vmax.f32 %v174, 0.0
    %v181 = vmax.f32 %v176, 0.0
    %v182 = vpack.c.bf16 %v180, %v180
    %v183 = vpack.c.bf16 %v181, %v181
    %v185 = vlaneseq
    %v186 = vshrl.u32 %v185, 7
    %v187 = vsub.s32 0, %v186
    %v188 = vrot.slane %v102, %v187
    %v189 = vlaneseq
    %v190 = vshrl.u32 %v189, 7
    %v191 = vsub.s32 1, %v190
    %v192 = vrot.slane %v102, %v191
    %v227 = vunpack.c.l.b16 %v67
    %v228 = vunpack.c.h.b16 %v67
    %v229 = vunpack.c.l.b16 %v68
    %v230 = vunpack.c.h.b16 %v68
    %v231 = vunpack.c.l.b16 %v69
    %v232 = vunpack.c.h.b16 %v69
    %v233 = vunpack.c.l.b16 %v70
    %v234 = vunpack.c.h.b16 %v70
    %v235 = vunpack.c.l.b16 %v71
    %v236 = vunpack.c.h.b16 %v71
    %v237 = vunpack.c.l.b16 %v72
    %v238 = vunpack.c.h.b16 %v72
    %v239 = vunpack.c.l.b16 %v73
    %v240 = vunpack.c.h.b16 %v73
    %v241 = vunpack.c.l.b16 %v74
    %v242 = vunpack.c.h.b16 %v74
    %v243 = vunpack.c.l.b16 %v75
    %v244 = vunpack.c.h.b16 %v75
    %v245 = vunpack.c.l.b16 %v76
    %v246 = vunpack.c.h.b16 %v76
    %v247 = vunpack.c.l.b16 %v77
    %v248 = vunpack.c.h.b16 %v77
    %v249 = vunpack.c.l.b16 %v78
    %v250 = vunpack.c.h.b16 %v78
    %v251 = vunpack.c.l.b16 %v79
    %v252 = vunpack.c.h.b16 %v79
    %v253 = vunpack.c.l.b16 %v80
    %v254 = vunpack.c.h.b16 %v80
    %v255 = vunpack.c.l.b16 %v81
    %v256 = vunpack.c.h.b16 %v81
    %v257 = vunpack.c.l.b16 %v82
    %v258 = vunpack.c.h.b16 %v82
    %v259 = vunpack.c.l.b16 %v83
    %v260 = vunpack.c.h.b16 %v83
    %v261 = vunpack.c.l.b16 %v84
    %v262 = vunpack.c.h.b16 %v84
    %v263 = vunpack.c.l.b16 %v85
    %v264 = vunpack.c.h.b16 %v85
    %v265 = vunpack.c.l.b16 %v86
    %v266 = vunpack.c.h.b16 %v86
    %v267 = vunpack.c.l.b16 %v87
    %v268 = vunpack.c.h.b16 %v87
    %v269 = vunpack.c.l.b16 %v88
    %v270 = vunpack.c.h.b16 %v88
    %v271 = vunpack.c.l.b16 %v89
    %v272 = vunpack.c.h.b16 %v89
    %v273 = vunpack.c.l.b16 %v90
    %v274 = vunpack.c.h.b16 %v90
    %v275 = vunpack.c.l.b16 %v91
    %v276 = vunpack.c.h.b16 %v91
    %v277 = vunpack.c.l.b16 %v92
    %v278 = vunpack.c.h.b16 %v92
    %v279 = vunpack.c.l.b16 %v93
    %v280 = vunpack.c.h.b16 %v93
    %v281 = vunpack.c.l.b16 %v94
    %v282 = vunpack.c.h.b16 %v94
    %v283 = vunpack.c.l.b16 %v95
    %v284 = vunpack.c.h.b16 %v95
    %v285 = vunpack.c.l.b16 %v96
    %v286 = vunpack.c.h.b16 %v96
    %v287 = vunpack.c.l.b16 %v97
    %v288 = vunpack.c.h.b16 %v97
    %v289 = vunpack.c.l.b16 %v98
    %v290 = vunpack.c.h.b16 %v98
    %v291 = vpack.c.b16 %v229, %v227
    %v292 = vpack.c.b16 %v230, %v228
    %v293 = vpack.c.b16 %v233, %v231
    %v294 = vpack.c.b16 %v234, %v232
    %v295 = vpack.c.b16 %v237, %v235
    %v296 = vpack.c.b16 %v238, %v236
    %v297 = vpack.c.b16 %v241, %v239
    %v298 = vpack.c.b16 %v242, %v240
    %v299 = vpack.c.b16 %v245, %v243
    %v300 = vpack.c.b16 %v246, %v244
    %v301 = vpack.c.b16 %v249, %v247
    %v302 = vpack.c.b16 %v250, %v248
    %v303 = vpack.c.b16 %v253, %v251
    %v304 = vpack.c.b16 %v254, %v252
    %v305 = vpack.c.b16 %v257, %v255
    %v306 = vpack.c.b16 %v258, %v256
    %v307 = vpack.c.b16 %v261, %v259
    %v308 = vpack.c.b16 %v262, %v260
    %v309 = vpack.c.b16 %v265, %v263
    %v310 = vpack.c.b16 %v266, %v264
    %v311 = vpack.c.b16 %v269, %v267
    %v312 = vpack.c.b16 %v270, %v268
    %v313 = vpack.c.b16 %v273, %v271
    %v314 = vpack.c.b16 %v274, %v272
    %v315 = vpack.c.b16 %v277, %v275
    %v316 = vpack.c.b16 %v278, %v276
    %v317 = vpack.c.b16 %v281, %v279
    %v318 = vpack.c.b16 %v282, %v280
    %v319 = vpack.c.b16 %v285, %v283
    %v320 = vpack.c.b16 %v286, %v284
    %v321 = vpack.c.b16 %v289, %v287
    %v322 = vpack.c.b16 %v290, %v288
    %355 = vmatprep.subr.bf16.mxu0 %v306
    %356 = vmatpush1.bf16.msra.mxu0 %v305
    %357 = vmatprep.subr.bf16.mxu0 %v304
    %358 = vmatpush1.bf16.msra.mxu0 %v303
    %359 = vmatprep.subr.bf16.mxu0 %v302
    %360 = vmatpush1.bf16.msra.mxu0 %v301
    %361 = vmatprep.subr.bf16.mxu0 %v300
    %362 = vmatpush1.bf16.msra.mxu0 %v299
    %363 = vmatprep.subr.bf16.mxu0 %v298
    %364 = vmatpush1.bf16.msra.mxu0 %v297
    %365 = vmatprep.subr.bf16.mxu0 %v296
    %366 = vmatpush1.bf16.msra.mxu0 %v295
    %367 = vmatprep.subr.bf16.mxu0 %v294
    %368 = vmatpush1.bf16.msra.mxu0 %v293
    %369 = vmatprep.subr.bf16.mxu0 %v292
    %370 = vmatpush1.bf16.msra.mxu0 %v291
    %371 = vmatprep.subr.bf16.mxu0 %v322
    %372 = vmatpush2.bf16.msra.mxu0 %v321
    %373 = vmatprep.subr.bf16.mxu0 %v320
    %374 = vmatpush2.bf16.msra.mxu0 %v319
    %375 = vmatprep.subr.bf16.mxu0 %v318
    %376 = vmatpush2.bf16.msra.mxu0 %v317
    %377 = vmatprep.subr.bf16.mxu0 %v316
    %378 = vmatpush2.bf16.msra.mxu0 %v315
    %379 = vmatprep.subr.bf16.mxu0 %v314
    %380 = vmatpush2.bf16.msra.mxu0 %v313
    %381 = vmatprep.subr.bf16.mxu0 %v312
    %382 = vmatpush2.bf16.msra.mxu0 %v311
    %383 = vmatprep.subr.bf16.mxu0 %v310
    %384 = vmatpush2.bf16.msra.mxu0 %v309
    %385 = vmatprep.subr.bf16.mxu0 %v308
    %386 = vmatpush2.bf16.msra.mxu0 %v307
    %387 = vmatprep.mubr.bf16.mxu0 %v183
    %388 = vmatmul.mubr.bf16.gmra.mxu0 %v182
    %v389 = vpop.f32.mrf.mxu0
    %v390 = vadd.f32 %v188, %v389
    %v391 = vpop.f32.mrf.mxu0
    %v392 = vadd.f32 %v192, %v391
    %v393 = vpop.f32.mrf.mxu0
    %v394 = vpop.f32.mrf.mxu0
    %395 = vdwg.mxu0
    %v396 = vmax.f32 %v390, 0.0
    %v397 = vmax.f32 %v392, 0.0
    %v398 = vpack.c.bf16 %v396, %v396
    %v399 = vpack.c.bf16 %v397, %v397
    %401 = vset.pattern.permute.xlu0 0
    %402 = vperm.xlu0 %401, %v103
    %v403 = vpop.permute.xlu0 %402
    %v406 = vunpack.c.l.b16 %v99
    %v407 = vunpack.c.h.b16 %v99
    %v408 = vpack.c.b16 %v406, %v406
    %v409 = vpack.c.b16 %v407, %v407
    %412 = vmatprep.subr.bf16.mxu0 0
    %413 = vmatpush1.bf16.xpose.msra.mxu0 0
    %414 = vmatprep.subr.bf16.mxu0 0
    %415 = vmatpush1.bf16.xpose.msra.mxu0 0
    %416 = vmatprep.subr.bf16.mxu0 0
    %417 = vmatpush1.bf16.xpose.msra.mxu0 0
    %418 = vmatprep.subr.bf16.mxu0 0
    %419 = vmatpush1.bf16.xpose.msra.mxu0 0
    %420 = vmatprep.subr.bf16.mxu0 0
    %421 = vmatpush1.bf16.xpose.msra.mxu0 0
    %422 = vmatprep.subr.bf16.mxu0 0
    %423 = vmatpush1.bf16.xpose.msra.mxu0 0
    %424 = vmatprep.subr.bf16.mxu0 0
    %425 = vmatpush1.bf16.xpose.msra.mxu0 0
    %426 = vmatprep.subr.bf16.mxu0 %v399
    %427 = vmatpush1.bf16.xpose.msra.mxu0 %v398
    %428 = vmatprep.subr.bf16.mxu0 0
    %429 = vmatpush2.bf16.xpose.msra.mxu0 0
    %430 = vmatprep.subr.bf16.mxu0 0
    %431 = vmatpush2.bf16.xpose.msra.mxu0 0
    %432 = vmatprep.subr.bf16.mxu0 0
    %433 = vmatpush2.bf16.xpose.msra.mxu0 0
    %434 = vmatprep.subr.bf16.mxu0 0
    %435 = vmatpush2.bf16.xpose.msra.mxu0 0
    %436 = vmatprep.subr.bf16.mxu0 0
    %437 = vmatpush2.bf16.xpose.msra.mxu0 0
    %438 = vmatprep.subr.bf16.mxu0 0
    %439 = vmatpush2.bf16.xpose.msra.mxu0 0
    %440 = vmatprep.subr.bf16.mxu0 0
    %441 = vmatpush2.bf16.xpose.msra.mxu0 0
    %442 = vmatprep.subr.bf16.mxu0 0
    %443 = vmatpush2.bf16.xpose.msra.mxu0 0
    %444 = vmatprep.mubr.bf16.mxu0 %v409
    %445 = vmatmul.mubr.bf16.gmra.mxu0 %v408
    %v446 = vpop.f32.mrf.mxu0
    %v447 = vadd.f32 %v403, %v446
    %v448 = vpop.f32.mrf.mxu0
    %v449 = vpop.f32.mrf.mxu0
    %v450 = vpop.f32.mrf.mxu0
    %451 = vdwg.mxu0
    %v452 = vxor.u32 %v447, 2147483648
    %v453 = vmul.f32 %v452, 1.442695
    %v454 = vpow.pop %v453
    %v455 = vadd.f32 %v454, 1.0
    %v456 = vrcp.pop %v455
    %v457 = vmul.f32 1.0, %v456
    %v458 = vmax.f32 %v457, 0.1
    %v459 = vmin.f32 %v458, 0.9
    %vm460 = vcmask 57344
    %461 = vst.msk [vmem:[#allocation6] sm:$0x1] %vm460, %v459
    // Predicated region
    $region26: #{discriminator_forward.1} parent=1 // pred_check
      _
    $region27: #{discriminator_forward.1} parent=1 // pred_check_branch
      %463 = sbr.rel (0) target = $region29
    $region28: #{discriminator_forward.1} parent=1 // pred_region
      %s465 = ssub.s32 16, 16
      %466 = vsyncadd [#allocation5], %s465
      %s468 = sshll.u32 [#allocation6], 4
      %s469 = int_to_ptr.vmem [resolvable:$true] %s468
      %471 = dma.vmem_to_hbm [thread:$0]  %s469, 16, %s5, [#allocation5]
    $region29: #{discriminator_forward.1} parent=1 // pred_fallthru
      _
    // Predicated region
    $region30: #{discriminator_forward.1} parent=1 // pred_check
      _
    $region31: #{discriminator_forward.1} parent=1 // pred_check_branch
      %473 = sbr.rel (0) target = $region33
    $region32: #{discriminator_forward.1} parent=1 // pred_region
      %474 = dma.done [#allocation5], 16
    $region33: #{discriminator_forward.1} parent=1 // pred_fallthru
      _
    %475 = vsyncpa [#allocation4], 1
    %476 = vsyncpa [#allocation5], 1

</llo_original>
